<compile_context>
chip_gen: v7x
topology: tpu7x:2x2x1
jax: 0.10.0
libtpu: 0.0.40
codegen_flags: <defaults>
</compile_context>

<pallas_src>
import jax
import jax.numpy as jnp
from jax.experimental import pallas as pl
from jax.experimental.pallas import tpu as pltpu


def _copy_kernel(x_ref, o_ref):
    # Identity copy of the current (tn, cols) tile; lane-dense on cols.
    o_ref[...] = x_ref[...]


def _largest_aligned_divisor(total, unit, cap):
    """Largest multiple of `unit` that divides `total` and is <= cap, or None."""
    t = min(cap, total)
    t = (t // unit) * unit
    while t >= unit:
        if total % t == 0:
            return t
        t -= unit
    return None


def _plan_copy_layout(N, F, dtype):
    """Pick a flattened 2D view (rows, cols) and a row-tile size tn.

    cols is a multiple of 128 (lane-dense, unmasked vst) whenever the total
    element count allows it; otherwise cols = F (full extent, always legal).
    tn is a multiple of the dtype-aware sublane unit (or the full row extent)
    and is capped so one tile is ~8 MiB -> 2 in + 2 out buffers ~= 32 MiB.
    """
    total = N * F
    itemsize = jnp.dtype(dtype).itemsize
    sublane_unit = max(8, 32 // itemsize)   # 8 (f32) / 16 (bf16) / 32 (int8/fp8)
    lane_cap = 4096                          # lanes per tile (multiple of 128)
    tile_cap_bytes = 8 * 1024 * 1024         # ~8 MiB per tile

    cols = _largest_aligned_divisor(total, 128, lane_cap)
    if cols is not None:
        rows = total // cols
    else:
        # F (and hence total) not a multiple of 128: full-F lanes (legal as
        # the full array extent); rows tiling below still bounds VMEM use.
        rows, cols = N, F

    max_tn = (tile_cap_bytes // (cols * itemsize)) // sublane_unit * sublane_unit
    max_tn = max(sublane_unit, max_tn)
    # Either a multiple of sublane_unit (aligned) or the full row extent (legal).
    tn = min(rows, max_tn)
    return rows, cols, tn


def _unflatten3d_pallas_copy(x, C, D, H, W):
    """Tiled identity-copy kernel, then a metadata reshape to (N, C, D, H, W)."""
    N, F = x.shape
    rows, cols, tn = _plan_copy_layout(N, F, x.dtype)
    itemsize = jnp.dtype(x.dtype).itemsize

    # Free contiguous reshape (pure metadata) into the tiling-friendly view.
    x2d = x.reshape(rows, cols)

    flat = pl.pallas_call(
        _copy_kernel,
        out_shape=jax.ShapeDtypeStruct((rows, cols), x.dtype),
        grid_spec=pltpu.PrefetchScalarGridSpec(
            num_scalar_prefetch=0,
            grid=(pl.cdiv(rows, tn),),            # partial last tile is fine
            in_specs=[pl.BlockSpec((tn, cols), lambda i: (i, 0))],
            out_specs=pl.BlockSpec((tn, cols), lambda i: (i, 0)),
        ),
        compiler_params=pltpu.CompilerParams(
            # Independent row-tiles -> shard across both TCs on v7x;
            # neutral on single-TC v5e/v6e.
            dimension_semantics=("parallel",),
            # 2 in + 2 out x ~8 MiB = ~32 MiB of buffers; raise the scoped
            # limit past v5e's 16 MiB default while staying well under
            # every generation's physical VMEM (v7x: 64 MiB).
            vmem_limit_bytes=48 * 1024 * 1024,
        ),
        # Pure mem-bound copy: let XLA see the real traffic for scheduling.
        cost_estimate=pl.CostEstimate(
            flops=0, transcendentals=0,
            bytes_accessed=2 * rows * cols * itemsize),
    )(x2d)

    # Zero-cost metadata reshape (equivalent of torch .view on a contiguous
    # row-major buffer) -- glue, not compute.
    return flat.reshape(N, C, D, H, W)


def unflatten3d(x, C, D, H, W, use_kernel=False):
    """Pallas/JAX equivalent of Unflatten3D.forward.

    Args:
      x: array of shape (N, C*D*H*W).
      use_kernel: if False (default, recommended) returns a pure metadata
        reshape -- unflatten is a view, not compute. If True, runs the tiled
        Pallas identity-copy kernel to materialize a fresh buffer.
    Returns:
      array of shape (N, C, D, H, W), same dtype, torch-.view element order.
    """
    N, F = x.shape
    assert F == C * D * H * W, f"feature dim {F} != C*D*H*W = {C * D * H * W}"

    if not use_kernel:
        # Fast path: zero HBM traffic, pure view/bitcast.
        return x.reshape(N, C, D, H, W)

    return _unflatten3d_pallas_copy(x, C, D, H, W)


if __name__ == "__main__":
    # Small shapes consistent with the module: N=2, C=4, D=2, H=4, W=4
    # => flattened feature size C*D*H*W = 128 (lane-dense).
    N, C, D, H, W = 2, 4, 2, 4, 4
    key = jax.random.PRNGKey(0)
    x = jax.random.normal(key, (N, C * D * H * W), dtype=jnp.float32)

    ref = x.reshape(N, C, D, H, W)

    # Recommended fast path: metadata-only reshape.
    out_fast = jax.block_until_ready(unflatten3d(x, C, D, H, W))
    assert out_fast.shape == (N, C, D, H, W), out_fast.shape
    assert out_fast.dtype == x.dtype
    assert jnp.array_equal(out_fast, ref), "fast path mismatch vs reference"

    # Kernel path (flattened lane-dense tiles, parallel grid, VMEM-safe).
    out_kernel = jax.block_until_ready(
        unflatten3d(x, C, D, H, W, use_kernel=True))
    assert out_kernel.shape == (N, C, D, H, W), out_kernel.shape
    assert out_kernel.dtype == x.dtype
    assert jnp.array_equal(out_kernel, ref), "kernel path mismatch vs reference"

    print("KERNEL_OK")
</pallas_src>

<mosaic_0001>
module attributes {stable_mosaic.version = 11 : i64} {
  func.func @_copy_kernel(%arg0: i32, %arg1: memref<1x256xf32, #tpu.memory_space<vmem>>, %arg2: memref<1x256xf32, #tpu.memory_space<vmem>>) attributes {dimension_semantics = [#tpu.dimension_semantics<parallel>], iteration_bounds = array<i64: 1>, scalar_prefetch = 0 : i64, scratch_operands = 0 : i64, tpu.core_type = #tpu.core_type<tc>, window_params = [{transform_indices = @transform_0, window_bounds = array<i64: 1, 256>}, {transform_indices = @transform_1, window_bounds = array<i64: 1, 256>}]} {
    %c0 = arith.constant 0 : index
    %c0_0 = arith.constant 0 : index
    %0 = vector.load %arg1[%c0, %c0_0] : memref<1x256xf32, #tpu.memory_space<vmem>>, vector<1x256xf32>
    %c0_1 = arith.constant 0 : index
    %c0_2 = arith.constant 0 : index
    %1 = vector.load %arg2[%c0_1, %c0_2] : memref<1x256xf32, #tpu.memory_space<vmem>>, vector<1x256xf32>
    tpu.vector_store %arg2[%c0_1, %c0_2], %0 {strides = array<i32>} : memref<1x256xf32, #tpu.memory_space<vmem>>, vector<1x256xf32>,
    return
  }
  func.func @transform_0(%arg0: i32) -> (i32, i32) {
    %c0_i32 = arith.constant 0 : i32
    %c0_i32_0 = arith.constant 0 : i32
    return %arg0, %c0_i32 : i32, i32
  }
  func.func @transform_1(%arg0: i32) -> (i32, i32) {
    %c0_i32 = arith.constant 0 : i32
    %c0_i32_0 = arith.constant 0 : i32
    return %arg0, %c0_i32 : i32, i32
  }
}

</mosaic_0001>

<llo_original>
// kernel: tpu_custom_call.1
$region0: #{tpu_custom_call.1}
  #allocation0 [shape = 'u32[]', space=smem, size = 0x4, offset = 0x4, fixed_abs, tag = 'smem constant byte address 0x4 - core index']
  #allocation1 [shape = 'u32[144,128]{1,0:T(1,128)}', space=vmem, size = 0x12000, scoped, tag = 'internal scratch']
  %s0 = inlined_call_operand.hbm [shape: f32[1,256], index: 0, kind: input, shape index: {}]
  %s1 = inlined_call_operand.hbm [shape: f32[1,256], index: 1, kind: output, shape index: {}]
  %s2 = sld [smem:[#allocation0]]
  $region18: #{tpu_custom_call.1} parent=0
    _
  %s4 = ssub.s32 1, %s2
  %s5 = scalar_select 0, %s4, %s2
  $region1: #{tpu_custom_call.1} parent=0
    #allocation2 [shape = 'u8[1024]{0}', space=vmem, size = 0x400, scoped, tag = 'input window, operand 0, single buffered']
    #allocation3 [shape = 's32[1]{0}', space=sflag, size = 0x4, scoped, tag = 'scoped memory for tpu_custom_call.1']
    #allocation4 [shape = 's32[1]{0}', space=sflag, size = 0x4, scoped, tag = 'scoped memory for tpu_custom_call.1']
    #allocation5 [shape = 'u8[1024]{0}', space=vmem, size = 0x400, scoped, tag = 'output window, operand 0, single buffered']
    %6 = vsyncpa [#allocation3], 0
    %7 = vsyncpa [#allocation4], 0
    // Predicated region
    $region2: #{tpu_custom_call.1} parent=1 // pred_check
      _
    $region3: #{tpu_custom_call.1} parent=1 // pred_check_branch
      %9 = sbr.rel (0) target = $region5
    $region4: #{tpu_custom_call.1} parent=1 // pred_region
      %s11 = ssub.s32 32, 32
      %12 = vsyncadd [#allocation3], %s11
      %s14 = sshll.u32 [#allocation2], 4
      %s15 = int_to_ptr.vmem [resolvable:$true] %s14
      %17 = dma.hbm_to_vmem [thread:$0]  %s0, 32, %s15, [#allocation3]
    $region5: #{tpu_custom_call.1} parent=1 // pred_fallthru
      _
    // Predicated region
    $region6: #{tpu_custom_call.1} parent=1 // pred_check
      _
    $region7: #{tpu_custom_call.1} parent=1 // pred_check_branch
      %19 = sbr.rel (0) target = $region9
    $region8: #{tpu_custom_call.1} parent=1 // pred_region
      %20 = dma.done [#allocation3], 32
    $region9: #{tpu_custom_call.1} parent=1 // pred_fallthru
      _
    %v21 = vld [vmem:[#allocation2] sm:$0x3]
    %v22 = vlaneseq
    %vm23 = vcmp.ge.s32.totalorder %v22, 0
    %vm24 = vcmp.lt.s32.totalorder %v22, 256
    %vm25 = vmand %vm23, %vm24
    %26 = vst.msk [vmem:[#allocation5] sm:$0x3] %vm25, %v21
    // Predicated region
    $region10: #{tpu_custom_call.1} parent=1 // pred_check
      _
    $region11: #{tpu_custom_call.1} parent=1 // pred_check_branch
      %28 = sbr.rel (0) target = $region13
    $region12: #{tpu_custom_call.1} parent=1 // pred_region
      %s30 = ssub.s32 32, 32
      %31 = vsyncadd [#allocation4], %s30
      %s33 = sshll.u32 [#allocation5], 4
      %s34 = int_to_ptr.vmem [resolvable:$true] %s33
      %36 = dma.vmem_to_hbm [thread:$0]  %s34, 32, %s1, [#allocation4]
    $region13: #{tpu_custom_call.1} parent=1 // pred_fallthru
      _
    // Predicated region
    $region14: #{tpu_custom_call.1} parent=1 // pred_check
      _
    $region15: #{tpu_custom_call.1} parent=1 // pred_check_branch
      %38 = sbr.rel (0) target = $region17
    $region16: #{tpu_custom_call.1} parent=1 // pred_region
      %39 = dma.done [#allocation4], 32
    $region17: #{tpu_custom_call.1} parent=1 // pred_fallthru
      _
    %40 = vsyncpa [#allocation3], 1
    %41 = vsyncpa [#allocation4], 1

</llo_original>
